<compile_context>
chip_gen: v6e
topology: v6e:2x2x1
jax: 0.10.0
libtpu: 0.0.40
codegen_flags: <defaults>
</compile_context>

<pallas_src>
import functools

import jax
import jax.numpy as jnp
from jax.experimental import pallas as pl
from jax.experimental.pallas import tpu as pltpu


NEG_SLOPE = 0.01      # torch.nn.LeakyReLU default
NEG_BIG = -1e30       # finite mask fill (avoids NaN for rows with no incident edges)
LANE = 128


def _leaky_relu(x):
    return jnp.where(x >= 0, x, NEG_SLOPE * x)


# ---------------------------------------------------------------------------
# Kernel 1: row-tiled dense layer  o = LeakyReLU(x @ W^T + b)   (used for K, V)
# ---------------------------------------------------------------------------
def _dense_kernel(x_ref, wt_ref, b_ref, o_ref):
    z = jnp.dot(x_ref[...], wt_ref[...], preferred_element_type=jnp.float32) + b_ref[...]
    o_ref[...] = _leaky_relu(z).astype(o_ref.dtype)


def _dense(x, w_t, b, *, tile_rows):
    rows, d_in = x.shape
    d_out = w_t.shape[1]
    return pl.pallas_call(
        _dense_kernel,
        out_shape=jax.ShapeDtypeStruct((rows, d_out), jnp.float32),
        grid_spec=pltpu.PrefetchScalarGridSpec(
            num_scalar_prefetch=0,
            grid=(rows // tile_rows,),
            in_specs=[
                pl.BlockSpec((tile_rows, d_in), lambda i: (i, 0)),
                pl.BlockSpec((d_in, d_out), lambda i: (0, 0)),
                pl.BlockSpec((1, d_out), lambda i: (0, 0)),
            ],
            out_specs=pl.BlockSpec((tile_rows, d_out), lambda i: (i, 0)),
        ),
        compiler_params=pltpu.CompilerParams(dimension_semantics=("parallel",)),
    )(x, w_t, b)


# ---------------------------------------------------------------------------
# Kernel 2: fused Q-projection + masked online-softmax attention + output matmul
# grid = (num_q_tiles [parallel], num_edge_tiles [arbitrary, innermost])
# ---------------------------------------------------------------------------
def _edge_attn_kernel(qin_ref, wq_ref, bq_ref, qgid_ref, k_ref, v_ref, egid_ref,
                      o_ref, q_scr, m_scr, l_scr, acc_scr, *, scale):
    ei = pl.program_id(1)

    @pl.when(ei == 0)
    def _():
        z = jnp.dot(qin_ref[...], wq_ref[...],
                    preferred_element_type=jnp.float32) + bq_ref[...]
        q_scr[...] = _leaky_relu(z)
        m_scr[...] = jnp.full_like(m_scr, NEG_BIG)
        l_scr[...] = jnp.zeros_like(l_scr)
        acc_scr[...] = jnp.zeros_like(acc_scr)

    # scores for this edge tile: (TQ, TE) = q (TQ, Dattn) · k (TE, Dattn)^T
    s = jax.lax.dot_general(
        q_scr[...], k_ref[...],
        dimension_numbers=(((1,), (1,)), ((), ())),
        preferred_element_type=jnp.float32) * scale

    # mask: query group id (node index / batch id) must equal the edge group id
    mask = qgid_ref[...] == egid_ref[...]          # (TQ,1) == (1,TE) -> (TQ,TE)
    s = jnp.where(mask, s, NEG_BIG)

    # online softmax update
    m_prev = m_scr[...]
    m_new = jnp.maximum(m_prev, s.max(axis=-1, keepdims=True))
    alpha = jnp.exp(m_prev - m_new)
    p = jnp.exp(s - m_new)
    l_scr[...] = alpha * l_scr[...] + p.sum(axis=-1, keepdims=True)
    acc_scr[...] = alpha * acc_scr[...] + jnp.dot(
        p, v_ref[...], preferred_element_type=jnp.float32)
    m_scr[...] = m_new

    @pl.when(ei == pl.num_programs(1) - 1)
    def _():
        o_ref[...] = (acc_scr[...] / l_scr[...]).astype(o_ref.dtype)


# ---------------------------------------------------------------------------
# Wrapper
# ---------------------------------------------------------------------------
def edge_attention(nodes, edges, edge_index, u, batch, params, *,
                   nodewise=True, tile_q=128, tile_e=128):
    N_v, d_v = nodes.shape
    N_e, d_e = edges.shape
    d_u = u.shape[1]
    d_attn = params["wq"].shape[0]

    s = edge_index[0]
    r = edge_index[1]
    u_b = u[batch]                                      # (N_v, d_u)

    # --- plain-JAX glue: concatenations, mask group ids, lane/sublane padding ---
    qin = jnp.concatenate([nodes, u_b], axis=1)         # (N_v, d_v+d_u)
    kin = jnp.concatenate([nodes[s], u_b[s]], axis=1)   # (N_e, d_v+d_u)
    vin = jnp.concatenate([edges, u_b[s]], axis=1)      # (N_e, d_e+d_u)

    if nodewise:
        q_gid = jnp.arange(N_v, dtype=jnp.int32)        # luz.nodewise_mask: edge e attends to node r[e]
        e_gid = r.astype(jnp.int32)
    else:
        q_gid = batch.astype(jnp.int32)                 # luz.batchwise_mask: same-graph edges
        e_gid = batch[s].astype(jnp.int32)

    def rup(a, m):
        return pl.cdiv(a, m) * m

    Nv_p = rup(N_v, tile_q)
    Ne_p = rup(N_e, tile_e)
    Dqk_in = rup(d_v + d_u, LANE)
    Dv_in = rup(d_e + d_u, LANE)
    Dattn = rup(d_attn, LANE)

    def pad2(x, rows, cols):
        return jnp.pad(x, ((0, rows - x.shape[0]), (0, cols - x.shape[1])))

    qin_p = pad2(qin.astype(jnp.float32), Nv_p, Dqk_in)
    kin_p = pad2(kin.astype(jnp.float32), Ne_p, Dqk_in)
    vin_p = pad2(vin.astype(jnp.float32), Ne_p, Dv_in)

    wqT = pad2(params["wq"].T.astype(jnp.float32), Dqk_in, Dattn)
    wkT = pad2(params["wk"].T.astype(jnp.float32), Dqk_in, Dattn)
    wvT = pad2(params["wv"].T.astype(jnp.float32), Dv_in, Dattn)
    bq = pad2(params["bq"].reshape(1, -1).astype(jnp.float32), 1, Dattn)
    bk = pad2(params["bk"].reshape(1, -1).astype(jnp.float32), 1, Dattn)
    bv = pad2(params["bv"].reshape(1, -1).astype(jnp.float32), 1, Dattn)

    q_gid_p = jnp.pad(q_gid, (0, Nv_p - N_v), constant_values=-2).reshape(Nv_p, 1)
    e_gid_p = jnp.pad(e_gid, (0, Ne_p - N_e), constant_values=-1).reshape(1, Ne_p)

    # K/V projections: computed once per edge tile (hoisted out of the attention loop).
    k = _dense(kin_p, wkT, bk, tile_rows=tile_e)        # (Ne_p, Dattn)
    v = _dense(vin_p, wvT, bv, tile_rows=tile_e)        # (Ne_p, Dattn)

    scale = 1.0 / float(d_attn) ** 0.5

    out_p = pl.pallas_call(
        functools.partial(_edge_attn_kernel, scale=scale),
        out_shape=jax.ShapeDtypeStruct((Nv_p, Dattn), jnp.float32),
        grid_spec=pltpu.PrefetchScalarGridSpec(
            num_scalar_prefetch=0,
            grid=(Nv_p // tile_q, Ne_p // tile_e),
            in_specs=[
                pl.BlockSpec((tile_q, Dqk_in), lambda i, j: (i, 0)),   # qin tile
                pl.BlockSpec((Dqk_in, Dattn), lambda i, j: (0, 0)),    # Wq^T
                pl.BlockSpec((1, Dattn), lambda i, j: (0, 0)),         # bq
                pl.BlockSpec((tile_q, 1), lambda i, j: (i, 0)),        # query group ids
                pl.BlockSpec((tile_e, Dattn), lambda i, j: (j, 0)),    # k tile
                pl.BlockSpec((tile_e, Dattn), lambda i, j: (j, 0)),    # v tile
                pl.BlockSpec((1, tile_e), lambda i, j: (0, j)),        # edge group ids
            ],
            out_specs=pl.BlockSpec((tile_q, Dattn), lambda i, j: (i, 0)),
            scratch_shapes=[
                pltpu.VMEM((tile_q, Dattn), jnp.float32),   # q
                pltpu.VMEM((tile_q, 1), jnp.float32),       # running max
                pltpu.VMEM((tile_q, 1), jnp.float32),       # running sum
                pltpu.VMEM((tile_q, Dattn), jnp.float32),   # output accumulator
            ],
        ),
        compiler_params=pltpu.CompilerParams(
            dimension_semantics=("parallel", "arbitrary"),
            vmem_limit_bytes=32 * 1024 * 1024,
        ),
    )(qin_p, wqT, bq, q_gid_p, k, v, e_gid_p)

    return out_p[:N_v, :d_attn]


# ---------------------------------------------------------------------------
# Pure-JAX reference (mirrors the PyTorch forward) for verification
# ---------------------------------------------------------------------------
def edge_attention_ref(nodes, edges, edge_index, u, batch, params, nodewise=True):
    hi = jax.lax.Precision.HIGHEST
    s, r = edge_index[0], edge_index[1]
    u_b = u[batch]
    qin = jnp.concatenate([nodes, u_b], axis=1)
    kin = jnp.concatenate([nodes[s], u_b[s]], axis=1)
    vin = jnp.concatenate([edges, u_b[s]], axis=1)
    q = _leaky_relu(jnp.dot(qin, params["wq"].T, precision=hi) + params["bq"])
    k = _leaky_relu(jnp.dot(kin, params["wk"].T, precision=hi) + params["bk"])
    v = _leaky_relu(jnp.dot(vin, params["wv"].T, precision=hi) + params["bv"])
    if nodewise:
        mask = jnp.arange(nodes.shape[0])[:, None] == r[None, :]
    else:
        mask = batch[:, None] == batch[s][None, :]
    scores = jnp.dot(q, k.T, precision=hi) / jnp.sqrt(jnp.float32(q.shape[1]))
    scores = jnp.where(mask, scores, NEG_BIG)
    attn = jax.nn.softmax(scores, axis=-1)
    return jnp.dot(attn, v, precision=hi)


if __name__ == "__main__":
    # TODO(synk): luz's exact masked-softmax convention for rows with zero incident edges
    # (-inf -> NaN in torch) is replaced by a finite -1e30 fill; the test graph gives every
    # node at least one incoming edge so the two conventions agree exactly.
    key = jax.random.PRNGKey(0)
    ks = jax.random.split(key, 8)

    N_v, N_e, d_v, d_e, d_u, d_attn, n_batch = 16, 24, 32, 16, 8, 32, 2

    nodes = jax.random.normal(ks[0], (N_v, d_v), dtype=jnp.float32)
    edges = jax.random.normal(ks[1], (N_e, d_e), dtype=jnp.float32)
    u = jax.random.normal(ks[2], (n_batch, d_u), dtype=jnp.float32)
    batch = jnp.concatenate([jnp.zeros(N_v // 2, jnp.int32),
                             jnp.ones(N_v - N_v // 2, jnp.int32)])

    senders = jax.random.randint(ks[3], (N_e,), 0, N_v, dtype=jnp.int32)
    extra_r = jax.random.randint(ks[4], (N_e - N_v,), 0, N_v, dtype=jnp.int32)
    receivers = jnp.concatenate([jnp.arange(N_v, dtype=jnp.int32), extra_r])
    edge_index = jnp.stack([senders, receivers])

    def linear_init(k, n_out, n_in):
        kw, kb = jax.random.split(k)
        bound = 1.0 / (n_in ** 0.5)
        w = jax.random.uniform(kw, (n_out, n_in), jnp.float32, -bound, bound)
        b = jax.random.uniform(kb, (n_out,), jnp.float32, -bound, bound)
        return w, b

    wq, bq = linear_init(ks[5], d_attn, d_v + d_u)
    wk, bk = linear_init(ks[6], d_attn, d_v + d_u)
    wv, bv = linear_init(ks[7], d_attn, d_e + d_u)
    params = dict(wq=wq, bq=bq, wk=wk, bk=bk, wv=wv, bv=bv)

    out = edge_attention(nodes, edges, edge_index, u, batch, params, nodewise=True)
    out = jax.block_until_ready(out)

    ref = edge_attention_ref(nodes, edges, edge_index, u, batch, params, nodewise=True)
    assert out.shape == (N_v, d_attn)
    max_err = float(jnp.max(jnp.abs(out - ref)))
    assert jnp.allclose(out, ref, atol=2e-3, rtol=2e-3), f"mismatch vs reference (max err {max_err})"

    print("KERNEL_OK")
</pallas_src>

<mosaic_0001>
module attributes {stable_mosaic.version = 11 : i64} {
  func.func @_dense_kernel(%arg0: i32, %arg1: memref<128x128xf32, #tpu.memory_space<vmem>>, %arg2: memref<128x128xf32, #tpu.memory_space<vmem>>, %arg3: memref<1x128xf32, #tpu.memory_space<vmem>>, %arg4: memref<128x128xf32, #tpu.memory_space<vmem>>) attributes {dimension_semantics = [#tpu.dimension_semantics<parallel>], iteration_bounds = array<i64: 1>, scalar_prefetch = 0 : i64, scratch_operands = 0 : i64, tpu.core_type = #tpu.core_type<tc>, window_params = [{transform_indices = @transform_0, window_bounds = array<i64: 128, 128>}, {pipeline_mode = #tpu.pipeline_mode<synchronous>, transform_indices = @transform_1, window_bounds = array<i64: 128, 128>}, {pipeline_mode = #tpu.pipeline_mode<synchronous>, transform_indices = @transform_2, window_bounds = array<i64: 1, 128>}, {transform_indices = @transform_3, window_bounds = array<i64: 128, 128>}]} {
    %c0 = arith.constant 0 : index
    %c0_0 = arith.constant 0 : index
    %0 = vector.load %arg1[%c0, %c0_0] : memref<128x128xf32, #tpu.memory_space<vmem>>, vector<128x128xf32>
    %c0_1 = arith.constant 0 : index
    %c0_2 = arith.constant 0 : index
    %1 = vector.load %arg2[%c0_1, %c0_2] : memref<128x128xf32, #tpu.memory_space<vmem>>, vector<128x128xf32>
    %cst = arith.constant dense<0.000000e+00> : vector<128x128xf32>
    %2 = tpu.matmul %0, %1, %cst {dimension_numbers = #tpu.dot_dimension_numbers<[1], [0], [0], [1], [0, 0, 1, 1], [], []>} : vector<128x128xf32>, vector<128x128xf32>, vector<128x128xf32> -> vector<128x128xf32>
    %c0_3 = arith.constant 0 : index
    %c0_4 = arith.constant 0 : index
    %3 = vector.load %arg3[%c0_3, %c0_4] : memref<1x128xf32, #tpu.memory_space<vmem>>, vector<1x128xf32>
    %4 = vector.broadcast %3 : vector<1x128xf32> to vector<128x128xf32>
    %5 = arith.addf %2, %4 : vector<128x128xf32>
    %cst_5 = arith.constant 0.000000e+00 : f32
    %6 = vector.broadcast %cst_5 : f32 to vector<128x128xf32>
    %7 = arith.cmpf oge, %5, %6 : vector<128x128xf32>
    %cst_6 = arith.constant 0.00999999977 : f32
    %8 = vector.broadcast %cst_6 : f32 to vector<128x128xf32>
    %9 = arith.mulf %8, %5 : vector<128x128xf32>
    %10 = arith.select %7, %5, %9 : vector<128x128xi1>, vector<128x128xf32>
    %c0_7 = arith.constant 0 : index
    %c0_8 = arith.constant 0 : index
    %11 = vector.load %arg4[%c0_7, %c0_8] : memref<128x128xf32, #tpu.memory_space<vmem>>, vector<128x128xf32>
    tpu.vector_store %arg4[%c0_7, %c0_8], %10 {strides = array<i32>} : memref<128x128xf32, #tpu.memory_space<vmem>>, vector<128x128xf32>,
    return
  }
  func.func @transform_0(%arg0: i32) -> (i32, i32) {
    %c0_i32 = arith.constant 0 : i32
    %c0_i32_0 = arith.constant 0 : i32
    return %arg0, %c0_i32 : i32, i32
  }
  func.func @transform_1(%arg0: i32) -> (i32, i32) {
    %c0_i32 = arith.constant 0 : i32
    %c0_i32_0 = arith.constant 0 : i32
    %c0_i32_1 = arith.constant 0 : i32
    return %c0_i32, %c0_i32_0 : i32, i32
  }
  func.func @transform_2(%arg0: i32) -> (i32, i32) {
    %c0_i32 = arith.constant 0 : i32
    %c0_i32_0 = arith.constant 0 : i32
    %c0_i32_1 = arith.constant 0 : i32
    return %c0_i32, %c0_i32_0 : i32, i32
  }
  func.func @transform_3(%arg0: i32) -> (i32, i32) {
    %c0_i32 = arith.constant 0 : i32
    %c0_i32_0 = arith.constant 0 : i32
    return %arg0, %c0_i32 : i32, i32
  }
}

</mosaic_0001>

<llo_original>
// kernel: tpu_custom_call.1
$region0: #{tpu_custom_call.1}
  #allocation0 [shape = 'u32[]', space=smem, size = 0x4, offset = 0x4, fixed_abs, tag = 'smem constant byte address 0x4 - core index']
  #allocation1 [shape = 'u32[144,128]{1,0:T(1,128)}', space=vmem, size = 0x12000, scoped, tag = 'internal scratch']
  %s0 = inlined_call_operand.hbm [shape: f32[128,128], index: 0, kind: input, shape index: {}]
  %s1 = inlined_call_operand.hbm [shape: f32[128,128], index: 1, kind: input, shape index: {}]
  %s2 = inlined_call_operand.vmem [shape: f32[1,128], index: 2, kind: input, shape index: {}]
  %s3 = inlined_call_operand.hbm [shape: f32[128,128], index: 3, kind: output, shape index: {}]
  %s4 = sld [smem:[#allocation0]]
  $region30: #{tpu_custom_call.1} parent=0
    _
  %s6 = ssub.s32 1, %s4
  %s7 = scalar_select 0, %s6, %s4
  $region1: #{tpu_custom_call.1} parent=0
    #allocation2 [shape = 'u8[65536]{0}', space=vmem, size = 0x10000, scoped, tag = 'input window, operand 0, single buffered']
    #allocation3 [shape = 's32[1]{0}', space=sflag, size = 0x4, scoped, tag = 'scoped memory for tpu_custom_call.1']
    #allocation4 [shape = 's32[1]{0}', space=sflag, size = 0x4, scoped, tag = 'scoped memory for tpu_custom_call.1']
    #allocation5 [shape = 'u8[65536]{0}', space=vmem, size = 0x10000, scoped, tag = 'input window, operand 1, single buffered']
    #allocation6 [shape = 's32[1]{0}', space=sflag, size = 0x4, scoped, tag = 'scoped memory for tpu_custom_call.1']
    #allocation7 [shape = 'u8[65536]{0}', space=vmem, size = 0x10000, scoped, tag = 'output window, operand 0, single buffered']
    %8 = vsyncpa [#allocation3], 0
    %9 = vsyncpa [#allocation6], 0
    %10 = vsyncpa [#allocation4], 0
    // Predicated region
    $region2: #{tpu_custom_call.1} parent=1 // pred_check
      _
    $region3: #{tpu_custom_call.1} parent=1 // pred_check_branch
      %12 = sbr.rel (0) target = $region5
    $region4: #{tpu_custom_call.1} parent=1 // pred_region
      %s14 = ssub.s32 2048, 2048
      %15 = vsyncadd [#allocation3], %s14
      %s16 = sshll.u32 [#allocation2], 4
      %s17 = int_to_ptr.vmem [resolvable:$true] %s16
      %22 = dma.hbm_to_vmem [thread:$0]  %s0, 2048, %s17, [#allocation3], 128, 128, 8
    $region5: #{tpu_custom_call.1} parent=1 // pred_fallthru
      _
    // Predicated region
    $region6: #{tpu_custom_call.1} parent=1 // pred_check
      _
    $region7: #{tpu_custom_call.1} parent=1 // pred_check_branch
      %24 = sbr.rel (0) target = $region9
    $region8: #{tpu_custom_call.1} parent=1 // pred_region
      %s26 = ssub.s32 2048, 2048
      %27 = vsyncadd [#allocation6], %s26
      %s28 = sshll.u32 [#allocation5], 4
      %s29 = int_to_ptr.vmem [resolvable:$true] %s28
      %34 = dma.hbm_to_vmem [thread:$0]  %s1, 2048, %s29, [#allocation6], 128, 128, 8
    $region9: #{tpu_custom_call.1} parent=1 // pred_fallthru
      _
    // Predicated region
    $region10: #{tpu_custom_call.1} parent=1 // pred_check
      _
    $region11: #{tpu_custom_call.1} parent=1 // pred_check_branch
      %36 = sbr.rel (0) target = $region13
    $region12: #{tpu_custom_call.1} parent=1 // pred_region
      _
    $region13: #{tpu_custom_call.1} parent=1 // pred_fallthru
      _
    // Predicated region
    $region14: #{tpu_custom_call.1} parent=1 // pred_check
      _
    $region15: #{tpu_custom_call.1} parent=1 // pred_check_branch
      %38 = sbr.rel (0) target = $region17
    $region16: #{tpu_custom_call.1} parent=1 // pred_region
      %39 = dma.done [#allocation3], 2048
    $region17: #{tpu_custom_call.1} parent=1 // pred_fallthru
      _
    // Predicated region
    $region18: #{tpu_custom_call.1} parent=1 // pred_check
      _
    $region19: #{tpu_custom_call.1} parent=1 // pred_check_branch
      %41 = sbr.rel (0) target = $region21
    $region20: #{tpu_custom_call.1} parent=1 // pred_region
      %42 = dma.done [#allocation6], 2048
    $region21: #{tpu_custom_call.1} parent=1 // pred_fallthru
      _
    %v43 = vld [vmem:[#allocation2] sm:$0xff]
    %v44 = vld [vmem:[#allocation2 + $0x8] sm:$0xff]
    %v45 = vld [vmem:[#allocation2 + $0x10] sm:$0xff]
    %v46 = vld [vmem:[#allocation2 + $0x18] sm:$0xff]
    %v47 = vld [vmem:[#allocation2 + $0x20] sm:$0xff]
    %v48 = vld [vmem:[#allocation2 + $0x28] sm:$0xff]
    %v49 = vld [vmem:[#allocation2 + $0x30] sm:$0xff]
    %v50 = vld [vmem:[#allocation2 + $0x38] sm:$0xff]
    %v51 = vld [vmem:[#allocation2 + $0x40] sm:$0xff]
    %v52 = vld [vmem:[#allocation2 + $0x48] sm:$0xff]
    %v53 = vld [vmem:[#allocation2 + $0x50] sm:$0xff]
    %v54 = vld [vmem:[#allocation2 + $0x58] sm:$0xff]
    %v55 = vld [vmem:[#allocation2 + $0x60] sm:$0xff]
    %v56 = vld [vmem:[#allocation2 + $0x68] sm:$0xff]
    %v57 = vld [vmem:[#allocation2 + $0x70] sm:$0xff]
    %v58 = vld [vmem:[#allocation2 + $0x78] sm:$0xff]
    %v59 = vld [vmem:[#allocation5] sm:$0xff]
    %v60 = vld [vmem:[#allocation5 + $0x8] sm:$0xff]
    %v61 = vld [vmem:[#allocation5 + $0x10] sm:$0xff]
    %v62 = vld [vmem:[#allocation5 + $0x18] sm:$0xff]
    %v63 = vld [vmem:[#allocation5 + $0x20] sm:$0xff]
    %v64 = vld [vmem:[#allocation5 + $0x28] sm:$0xff]
    %v65 = vld [vmem:[#allocation5 + $0x30] sm:$0xff]
    %v66 = vld [vmem:[#allocation5 + $0x38] sm:$0xff]
    %v67 = vld [vmem:[#allocation5 + $0x40] sm:$0xff]
    %v68 = vld [vmem:[#allocation5 + $0x48] sm:$0xff]
    %v69 = vld [vmem:[#allocation5 + $0x50] sm:$0xff]
    %v70 = vld [vmem:[#allocation5 + $0x58] sm:$0xff]
    %v71 = vld [vmem:[#allocation5 + $0x60] sm:$0xff]
    %v72 = vld [vmem:[#allocation5 + $0x68] sm:$0xff]
    %v73 = vld [vmem:[#allocation5 + $0x70] sm:$0xff]
    %v74 = vld [vmem:[#allocation5 + $0x78] sm:$0xff]
    %v75 = vld [vmem:[%s2] sm:$0x1]
    %v77 = vlaneseq
    %v78 = vshrl.u32 %v77, 7
    %v79 = vsub.s32 0, %v78
    %v80 = vrot.slane %v75, %v79
    %82 = vmatprep.subr.mxu0 0.0
    %83 = vmatpush1.msra.mxu0 %v74
    %84 = vmatprep.subr.mxu0 0.0
    %85 = vmatpush1.msra.mxu0 %v73
    %86 = vmatprep.subr.mxu0 0.0
    %87 = vmatpush1.msra.mxu0 %v72
    %88 = vmatprep.subr.mxu0 0.0
    %89 = vmatpush1.msra.mxu0 %v71
    %90 = vmatprep.subr.mxu0 0.0
    %91 = vmatpush1.msra.mxu0 %v70
    %92 = vmatprep.subr.mxu0 0.0
    %93 = vmatpush1.msra.mxu0 %v69
    %94 = vmatprep.subr.mxu0 0.0
    %95 = vmatpush1.msra.mxu0 %v68
    %96 = vmatprep.subr.mxu0 0.0
    %97 = vmatpush1.msra.mxu0 %v67
    %98 = vmatprep.subr.mxu0 0.0
    %99 = vmatpush1.msra.mxu0 %v66
    %100 = vmatprep.subr.mxu0 0.0
    %101 = vmatpush1.msra.mxu0 %v65
    %102 = vmatprep.subr.mxu0 0.0
    %103 = vmatpush1.msra.mxu0 %v64
    %104 = vmatprep.subr.mxu0 0.0
    %105 = vmatpush1.msra.mxu0 %v63
    %106 = vmatprep.subr.mxu0 0.0
    %107 = vmatpush1.msra.mxu0 %v62
    %108 = vmatprep.subr.mxu0 0.0
    %109 = vmatpush1.msra.mxu0 %v61
    %110 = vmatprep.subr.mxu0 0.0
    %111 = vmatpush1.msra.mxu0 %v60
    %112 = vmatprep.subr.mxu0 0.0
    %113 = vmatpush1.msra.mxu0 %v59
    %114 = vmatprep.subr.mxu0 0.0
    %115 = vmatpush2.msra.mxu0 0.0
    %116 = vmatprep.subr.mxu0 0.0
    %117 = vmatpush2.msra.mxu0 0.0
    %118 = vmatprep.subr.mxu0 0.0
    %119 = vmatpush2.msra.mxu0 0.0
    %120 = vmatprep.subr.mxu0 0.0
    %121 = vmatpush2.msra.mxu0 0.0
    %122 = vmatprep.subr.mxu0 0.0
    %123 = vmatpush2.msra.mxu0 0.0
    %124 = vmatprep.subr.mxu0 0.0
    %125 = vmatpush2.msra.mxu0 0.0
    %126 = vmatprep.subr.mxu0 0.0
    %127 = vmatpush2.msra.mxu0 0.0
    %128 = vmatprep.subr.mxu0 0.0
    %129 = vmatpush2.msra.mxu0 0.0
    %130 = vmatprep.subr.mxu0 0.0
    %131 = vmatpush2.msra.mxu0 0.0
    %132 = vmatprep.subr.mxu0 0.0
    %133 = vmatpush2.msra.mxu0 0.0
    %134 = vmatprep.subr.mxu0 0.0
    %135 = vmatpush2.msra.mxu0 0.0
    %136 = vmatprep.subr.mxu0 0.0
    %137 = vmatpush2.msra.mxu0 0.0
    %138 = vmatprep.subr.mxu0 0.0
    %139 = vmatpush2.msra.mxu0 0.0
    %140 = vmatprep.subr.mxu0 0.0
    %141 = vmatpush2.msra.mxu0 0.0
    %142 = vmatprep.subr.mxu0 0.0
    %143 = vmatpush2.msra.mxu0 0.0
    %144 = vmatprep.subr.mxu0 0.0
    %145 = vmatpush2.msra.mxu0 0.0
    %146 = vmatprep.mubr.f32.mxu0 0.0
    %147 = vmatmul.mubr.f32.gmra.mxu0 %v43
    %v148 = vpop.f32.mrf.mxu0
    %v149 = vadd.f32 %v80, %v148
    %v150 = vpop.f32.mrf.mxu0
    %151 = vmatprep.mubr.f32.mxu0 0.0
    %152 = vmatmul.mubr.f32.gmra.mxu0 %v44
    %v153 = vpop.f32.mrf.mxu0
    %v154 = vadd.f32 %v80, %v153
    %v155 = vpop.f32.mrf.mxu0
    %156 = vmatprep.mubr.f32.mxu0 0.0
    %157 = vmatmul.mubr.f32.gmra.mxu0 %v45
    %v158 = vpop.f32.mrf.mxu0
    %v159 = vadd.f32 %v80, %v158
    %v160 = vpop.f32.mrf.mxu0
    %161 = vmatprep.mubr.f32.mxu0 0.0
    %162 = vmatmul.mubr.f32.gmra.mxu0 %v46
    %v163 = vpop.f32.mrf.mxu0
    %v164 = vadd.f32 %v80, %v163
    %v165 = vpop.f32.mrf.mxu0
    %166 = vmatprep.mubr.f32.mxu0 0.0
    %167 = vmatmul.mubr.f32.gmra.mxu0 %v47
    %v168 = vpop.f32.mrf.mxu0
    %v169 = vadd.f32 %v80, %v168
    %v170 = vpop.f32.mrf.mxu0
    %171 = vmatprep.mubr.f32.mxu0 0.0
    %172 = vmatmul.mubr.f32.gmra.mxu0 %v48
    %v173 = vpop.f32.mrf.mxu0
    %v174 = vadd.f32 %v80, %v173
    %v175 = vpop.f32.mrf.mxu0
    %176 = vmatprep.mubr.f32.mxu0 0.0
    %177 = vmatmul.mubr.f32.gmra.mxu0 %v49
    %v178 = vpop.f32.mrf.mxu0
    %v179 = vadd.f32 %v80, %v178
    %v180 = vpop.f32.mrf.mxu0
    %181 = vmatprep.mubr.f32.mxu0 0.0
    %182 = vmatmul.mubr.f32.gmra.mxu0 %v50
    %v183 = vpop.f32.mrf.mxu0
    %v184 = vadd.f32 %v80, %v183
    %v185 = vpop.f32.mrf.mxu0
    %186 = vmatprep.mubr.f32.mxu0 0.0
    %187 = vmatmul.mubr.f32.gmra.mxu0 %v51
    %v188 = vpop.f32.mrf.mxu0
    %v189 = vadd.f32 %v80, %v188
    %v190 = vpop.f32.mrf.mxu0
    %191 = vmatprep.mubr.f32.mxu0 0.0
    %192 = vmatmul.mubr.f32.gmra.mxu0 %v52
    %v193 = vpop.f32.mrf.mxu0
    %v194 = vadd.f32 %v80, %v193
    %v195 = vpop.f32.mrf.mxu0
    %196 = vmatprep.mubr.f32.mxu0 0.0
    %197 = vmatmul.mubr.f32.gmra.mxu0 %v53
    %v198 = vpop.f32.mrf.mxu0
    %v199 = vadd.f32 %v80, %v198
    %v200 = vpop.f32.mrf.mxu0
    %201 = vmatprep.mubr.f32.mxu0 0.0
    %202 = vmatmul.mubr.f32.gmra.mxu0 %v54
    %v203 = vpop.f32.mrf.mxu0
    %v204 = vadd.f32 %v80, %v203
    %v205 = vpop.f32.mrf.mxu0
    %206 = vmatprep.mubr.f32.mxu0 0.0
    %207 = vmatmul.mubr.f32.gmra.mxu0 %v55
    %v208 = vpop.f32.mrf.mxu0
    %v209 = vadd.f32 %v80, %v208
    %v210 = vpop.f32.mrf.mxu0
    %211 = vmatprep.mubr.f32.mxu0 0.0
    %212 = vmatmul.mubr.f32.gmra.mxu0 %v56
    %v213 = vpop.f32.mrf.mxu0
    %v214 = vadd.f32 %v80, %v213
    %v215 = vpop.f32.mrf.mxu0
    %216 = vmatprep.mubr.f32.mxu0 0.0
    %217 = vmatmul.mubr.f32.gmra.mxu0 %v57
    %v218 = vpop.f32.mrf.mxu0
    %v219 = vadd.f32 %v80, %v218
    %v220 = vpop.f32.mrf.mxu0
    %221 = vmatprep.mubr.f32.mxu0 0.0
    %222 = vmatmul.mubr.f32.gmra.mxu0 %v58
    %v223 = vpop.f32.mrf.mxu0
    %v224 = vadd.f32 %v80, %v223
    %v225 = vpop.f32.mrf.mxu0
    %226 = vdwg.mxu0
    %vm227 = vcmp.ge.f32.partialorder %v149, 0.0
    %vm228 = vcmp.ge.f32.partialorder %v154, 0.0
    %vm229 = vcmp.ge.f32.partialorder %v159, 0.0
    %vm230 = vcmp.ge.f32.partialorder %v164, 0.0
    %vm231 = vcmp.ge.f32.partialorder %v169, 0.0
    %vm232 = vcmp.ge.f32.partialorder %v174, 0.0
    %vm233 = vcmp.ge.f32.partialorder %v179, 0.0
    %vm234 = vcmp.ge.f32.partialorder %v184, 0.0
    %vm235 = vcmp.ge.f32.partialorder %v189, 0.0
    %vm236 = vcmp.ge.f32.partialorder %v194, 0.0
    %vm237 = vcmp.ge.f32.partialorder %v199, 0.0
    %vm238 = vcmp.ge.f32.partialorder %v204, 0.0
    %vm239 = vcmp.ge.f32.partialorder %v209, 0.0
    %vm240 = vcmp.ge.f32.partialorder %v214, 0.0
    %vm241 = vcmp.ge.f32.partialorder %v219, 0.0
    %vm242 = vcmp.ge.f32.partialorder %v224, 0.0
    %v243 = vmul.f32 %v149, 0.01
    %v244 = vmul.f32 %v154, 0.01
    %v245 = vmul.f32 %v159, 0.01
    %v246 = vmul.f32 %v164, 0.01
    %v247 = vmul.f32 %v169, 0.01
    %v248 = vmul.f32 %v174, 0.01
    %v249 = vmul.f32 %v179, 0.01
    %v250 = vmul.f32 %v184, 0.01
    %v251 = vmul.f32 %v189, 0.01
    %v252 = vmul.f32 %v194, 0.01
    %v253 = vmul.f32 %v199, 0.01
    %v254 = vmul.f32 %v204, 0.01
    %v255 = vmul.f32 %v209, 0.01
    %v256 = vmul.f32 %v214, 0.01
    %v257 = vmul.f32 %v219, 0.01
    %v258 = vmul.f32 %v224, 0.01
    %v259 = vsel %vm227, %v149, %v243
    %v260 = vsel %vm228, %v154, %v244
    %v261 = vsel %vm229, %v159, %v245
    %v262 = vsel %vm230, %v164, %v246
    %v263 = vsel %vm231, %v169, %v247
    %v264 = vsel %vm232, %v174, %v248
    %v265 = vsel %vm233, %v179, %v249
    %v266 = vsel %vm234, %v184, %v250
    %v267 = vsel %vm235, %v189, %v251
    %v268 = vsel %vm236, %v194, %v252
    %v269 = vsel %vm237, %v199, %v253
    %v270 = vsel %vm238, %v204, %v254
    %v271 = vsel %vm239, %v209, %v255
    %v272 = vsel %vm240, %v214, %v256
    %v273 = vsel %vm241, %v219, %v257
    %v274 = vsel %vm242, %v224, %v258
    %275 = vst [vmem:[#allocation7] sm:$0xff] %v259
    %276 = vst [vmem:[#allocation7 + $0x8] sm:$0xff] %v260
    %277 = vst [vmem:[#allocation7 + $0x10] sm:$0xff] %v261
    %278 = vst [vmem:[#allocation7 + $0x18] sm:$0xff] %v262
    %279 = vst [vmem:[#allocation7 + $0x20] sm:$0xff] %v263
    %280 = vst [vmem:[#allocation7 + $0x28] sm:$0xff] %v264
    %281 = vst [vmem:[#allocation7 + $0x30] sm:$0xff] %v265
    %282 = vst [vmem:[#allocation7 + $0x38] sm:$0xff] %v266
    %283 = vst [vmem:[#allocation7 + $0x40] sm:$0xff] %v267
    %284 = vst [vmem:[#allocation7 + $0x48] sm:$0xff] %v268
    %285 = vst [vmem:[#allocation7 + $0x50] sm:$0xff] %v269
    %286 = vst [vmem:[#allocation7 + $0x58] sm:$0xff] %v270
    %287 = vst [vmem:[#allocation7 + $0x60] sm:$0xff] %v271
    %288 = vst [vmem:[#allocation7 + $0x68] sm:$0xff] %v272
    %289 = vst [vmem:[#allocation7 + $0x70] sm:$0xff] %v273
    %290 = vst [vmem:[#allocation7 + $0x78] sm:$0xff] %v274
    // Predicated region
    $region22: #{tpu_custom_call.1} parent=1 // pred_check
      _
    $region23: #{tpu_custom_call.1} parent=1 // pred_check_branch
      %292 = sbr.rel (0) target = $region25
    $region24: #{tpu_custom_call.1} parent=1 // pred_region
      %s294 = ssub.s32 2048, 2048
      %295 = vsyncadd [#allocation4], %s294
      %s296 = sshll.u32 [#allocation7], 4
      %s297 = int_to_ptr.vmem [resolvable:$true] %s296
      %302 = dma.vmem_to_hbm [thread:$0]  %s297, 2048, %s3, [#allocation4], 128, 128, 8
    $region25: #{tpu_custom_call.1} parent=1 // pred_fallthru
      _
    // Predicated region
    $region26: #{tpu_custom_call.1} parent=1 // pred_check
      _
    $region27: #{tpu_custom_call.1} parent=1 // pred_check_branch
      %304 = sbr.rel (0) target = $region29
    $region28: #{tpu_custom_call.1} parent=1 // pred_region
      %305 = dma.done [#allocation4], 2048
    $region29: #{tpu_custom_call.1} parent=1 // pred_fallthru
      _
    %306 = vsyncpa [#allocation3], 1
    %307 = vsyncpa [#allocation6], 1
    %308 = vsyncpa [#allocation4], 1

</llo_original>
